<compile_context>
chip_gen: v7x
topology: tpu7x:2x2x1
jax: 0.10.0
libtpu: 0.0.40
codegen_flags: <defaults>
</compile_context>

<pallas_src>
import jax
import jax.numpy as jnp
from jax.experimental import pallas as pl
from jax.experimental.pallas import tpu as pltpu


# --------------------------------------------------------------------------- #
# Helpers
# --------------------------------------------------------------------------- #
def _round_up(x, m):
    return ((x + m - 1) // m) * m


def _cdiv(a, b):
    return -(-a // b)


def _sublane_pack(dtype):
    # f32 -> 8 sublanes, bf16 -> 16, int8/fp8 -> 32.
    return max(8, 32 // jnp.dtype(dtype).itemsize)


def _vmem_capacity_bytes():
    try:
        return int(pltpu.get_tpu_info().vmem_capacity_bytes)
    except Exception:
        return 64 * 1024 * 1024  # conservative fallback (v7x per-TensorCore)


def _maybe_buffered_spec(block_shape, index_map, buffers):
    """BlockSpec with an optional deeper pipeline; falls back gracefully."""
    if buffers <= 2:
        return pl.BlockSpec(block_shape, index_map)
    try:
        return pl.BlockSpec(block_shape, index_map, pipeline_mode=pl.Buffered(buffers))
    except TypeError:
        return pl.BlockSpec(block_shape, index_map)


def _pad_sizes(feat, num_labels, tile_k_cap, tile_n_cap):
    """Lane-dense K/N tiling with minimal zero padding.

    Returns (tile_k, k_pad, tile_n, n_pad). Depends only on (feat, num_labels,
    caps), NOT on num_qrys, so padded weights can be cached at model init.
    """
    # K (feature) axis.
    k128 = _round_up(feat, 128)
    tile_k_cap = max(128, (tile_k_cap // 128) * 128)
    if k128 <= tile_k_cap:
        tile_k, k_pad = k128, k128            # full-K: K grid axis collapses to 1
    else:
        k_tiles = _cdiv(k128, tile_k_cap)
        tile_k = _round_up(_cdiv(k128, k_tiles), 128)
        k_pad = tile_k * k_tiles
    # N (label) axis.
    n128 = _round_up(num_labels, 128)
    tile_n_cap = max(128, (tile_n_cap // 128) * 128)
    if n128 <= tile_n_cap:
        tile_n, n_pad = n128, n128
    else:
        n_tiles = _cdiv(n128, tile_n_cap)
        tile_n = _round_up(_cdiv(n128, n_tiles), 128)
        n_pad = tile_n * n_tiles
    return tile_k, k_pad, tile_n, n_pad


def prepare_cls_head_params(weight, bias, *, tile_n=512, tile_k=2048,
                            compute_dtype=None):
    """Pad + cast the classifier weight/bias once (cache at model init).

    Feed the returned pair to cls_head_pred(..., prepared_params=...) (with
    the SAME tile_n/tile_k/compute_dtype) so the per-call hot path does not
    re-pad / re-cast W (which roughly doubles HBM traffic for this W-dominated
    head at small query counts).
    """
    feat, num_labels = weight.shape
    if compute_dtype is None:
        compute_dtype = weight.dtype
    _, k_pad, _, n_pad = _pad_sizes(feat, num_labels, tile_k, tile_n)

    w_p = weight
    if (k_pad, n_pad) != (feat, num_labels):
        w_p = jnp.pad(w_p, ((0, k_pad - feat), (0, n_pad - num_labels)))
    if w_p.dtype != jnp.dtype(compute_dtype):
        w_p = w_p.astype(compute_dtype)

    b_p = bias
    if n_pad != num_labels:
        b_p = jnp.pad(b_p, (0, n_pad - num_labels))
    b_p = b_p.reshape(1, n_pad).astype(jnp.float32)
    return w_p, b_p


# --------------------------------------------------------------------------- #
# Kernels
# --------------------------------------------------------------------------- #
def _cls_logits_fullk_kernel(x_ref, w_ref, b_ref, o_ref):
    """Single K step: no accumulator scratch, no init/finalize branches."""
    acc = jnp.dot(x_ref[...], w_ref[...], preferred_element_type=jnp.float32)
    o_ref[...] = (acc + b_ref[...].astype(jnp.float32)).astype(o_ref.dtype)


def _cls_logits_ktiled_kernel(x_ref, w_ref, b_ref, o_ref, acc_ref):
    """K-tiled path: f32 accumulator scratch, K is the (arbitrary) reduction axis."""
    k = pl.program_id(2)

    @pl.when(k == 0)
    def _init():
        acc_ref[...] = jnp.zeros_like(acc_ref)

    acc_ref[...] += jnp.dot(x_ref[...], w_ref[...],
                            preferred_element_type=jnp.float32)

    @pl.when(k == pl.num_programs(2) - 1)
    def _finalize():
        o_ref[...] = (acc_ref[...] + b_ref[...].astype(jnp.float32)).astype(o_ref.dtype)


# --------------------------------------------------------------------------- #
# Wrapper
# --------------------------------------------------------------------------- #
def cls_head_pred(qry_feats, weight, bias, *,
                  tile_q=256, tile_n=512, tile_k=2048,
                  compute_dtype=None, out_dtype=jnp.float32,
                  prepared_params=None):
    """Pallas implementation of BaseClsHead.forward_pred's logits module.

    Args:
        qry_feats: [num_qrys, qry_feat_size]
        weight:    [qry_feat_size, num_labels]
        bias:      [num_labels]
        tile_q/tile_n/tile_k: tile caps (auto-shrunk for small inputs / VMEM).
        compute_dtype: matmul operand dtype (jnp.bfloat16 = MXU fast path).
            Defaults to qry_feats.dtype. Accumulation and bias add stay f32.
        out_dtype: output dtype (bf16 halves output write traffic if desired).
        prepared_params: optional (w_padded, b_padded) from
            prepare_cls_head_params (same tile/dtype settings) to skip the
            per-call W pad/cast.
    Returns:
        cls_logits: [num_qrys, num_labels] in out_dtype.
    """
    num_qrys, feat = qry_feats.shape
    num_labels = weight.shape[1]
    if compute_dtype is None:
        compute_dtype = qry_feats.dtype

    in_bytes = jnp.dtype(compute_dtype).itemsize
    out_bytes = jnp.dtype(out_dtype).itemsize
    pack = max(_sublane_pack(compute_dtype), _sublane_pack(out_dtype))

    # ---- K/N tiling (padding depends only on feat/num_labels/caps).
    tile_k, k_pad, tile_n, n_pad = _pad_sizes(feat, num_labels, tile_k, tile_n)
    k_tiles = k_pad // tile_k

    # ---- Q tile: dtype-aware sublane packing, up to 256 rows (full MXU pass).
    tile_q = _round_up(min(max(tile_q, pack), _round_up(num_qrys, pack)), pack)
    q_tiles = _cdiv(num_qrys, tile_q)

    # ---- Guarantee >=2 parallel (i, j) blocks so the 2nd v7x TensorCore has
    #      work; keeps n_pad unchanged so prepared (padded) weights stay valid.
    #      On single-TC chips this only adds one ~0.35us grid step.
    if q_tiles == 1 and n_pad // tile_n == 1:
        if n_pad % 256 == 0:
            tile_n = n_pad // 2
        elif n_pad >= 3 * 128:
            tile_n = 128

    # ---- Generation-aware VMEM budget; shrink tiles if they would not fit.
    def _footprint(tq, tn, wbuf):
        fp = (2 * tq * tile_k * in_bytes          # x double-buffer
              + wbuf * tile_k * tn * in_bytes     # W pipeline buffers
              + 2 * tn * 4                        # bias (f32) double-buffer
              + 2 * tq * tn * out_bytes)          # output double-buffer
        if k_tiles > 1:
            fp += tq * tn * 4                     # f32 accumulator scratch
        return fp

    vmem_budget = (3 * _vmem_capacity_bytes()) // 4
    while _footprint(tile_q, tile_n, 2) > vmem_budget:
        if tile_n % 256 == 0:
            tile_n //= 2                          # still a multiple of 128, divides n_pad
        elif tile_n > 128:
            tile_n = 128
        elif tile_q > pack:
            tile_q = max(pack, _round_up(tile_q // 2, pack))
            q_tiles = _cdiv(num_qrys, tile_q)
        else:
            break
    n_tiles = n_pad // tile_n

    # ---- GEMV-like regime: deepen the W pipeline if the budget allows.
    w_buffers = 2
    if (num_qrys <= 64 and n_tiles * k_tiles >= 3
            and _footprint(tile_q, tile_n, 3) <= vmem_budget):
        w_buffers = 3

    q_pad = q_tiles * tile_q
    est_vmem = _footprint(tile_q, tile_n, w_buffers)
    vmem_limit = int(min(vmem_budget, max(2 * est_vmem, 32 * 1024 * 1024)))

    # ---- Operands. W/b pad+cast is hoisted via prepared_params when cached.
    x_p = qry_feats
    if (q_pad, k_pad) != (num_qrys, feat):
        x_p = jnp.pad(x_p, ((0, q_pad - num_qrys), (0, k_pad - feat)))
    if x_p.dtype != jnp.dtype(compute_dtype):
        x_p = x_p.astype(compute_dtype)

    if prepared_params is not None:
        w_p, b_p = prepared_params
        assert w_p.shape == (k_pad, n_pad) and w_p.dtype == jnp.dtype(compute_dtype), \
            "prepared_params do not match this call's tile/dtype settings"
        assert b_p.shape == (1, n_pad)
    else:
        w_p = weight
        if (k_pad, n_pad) != (feat, num_labels):
            w_p = jnp.pad(w_p, ((0, k_pad - feat), (0, n_pad - num_labels)))
        if w_p.dtype != jnp.dtype(compute_dtype):
            w_p = w_p.astype(compute_dtype)
        b_p = bias
        if n_pad != num_labels:
            b_p = jnp.pad(b_p, (0, n_pad - num_labels))
        b_p = b_p.reshape(1, n_pad).astype(jnp.float32)

    # ---- Grid / specs.
    if k_tiles == 1:
        grid = (q_tiles, n_tiles)
        in_specs = [
            pl.BlockSpec((tile_q, tile_k), lambda i, j: (i, 0)),
            _maybe_buffered_spec((tile_k, tile_n), lambda i, j: (0, j), w_buffers),
            pl.BlockSpec((1, tile_n), lambda i, j: (0, j)),
        ]
        out_spec = pl.BlockSpec((tile_q, tile_n), lambda i, j: (i, j))
        kernel = _cls_logits_fullk_kernel
        scratch = []
        dims = ("parallel", "parallel")
    else:
        grid = (q_tiles, n_tiles, k_tiles)
        in_specs = [
            pl.BlockSpec((tile_q, tile_k), lambda i, j, k: (i, k)),
            _maybe_buffered_spec((tile_k, tile_n), lambda i, j, k: (k, j), w_buffers),
            pl.BlockSpec((1, tile_n), lambda i, j, k: (0, j)),
        ]
        out_spec = pl.BlockSpec((tile_q, tile_n), lambda i, j, k: (i, j))
        kernel = _cls_logits_ktiled_kernel
        scratch = [pltpu.VMEM((tile_q, tile_n), jnp.float32)]
        dims = ("parallel", "parallel", "arbitrary")

    cost = pl.CostEstimate(
        flops=2 * q_pad * k_pad * n_pad,
        transcendentals=0,
        bytes_accessed=(q_pad * k_pad * in_bytes * (n_tiles if k_tiles > 1 else 1)
                        + q_tiles * k_pad * n_pad * in_bytes
                        + q_tiles * n_pad * 4
                        + q_pad * n_pad * out_bytes),
    )

    out_p = pl.pallas_call(
        kernel,
        out_shape=jax.ShapeDtypeStruct((q_pad, n_pad), out_dtype),
        grid_spec=pltpu.PrefetchScalarGridSpec(
            num_scalar_prefetch=0,
            grid=grid,
            in_specs=in_specs,
            out_specs=out_spec,
            scratch_shapes=scratch,
        ),
        compiler_params=pltpu.CompilerParams(
            dimension_semantics=dims,
            vmem_limit_bytes=vmem_limit,
        ),
        cost_estimate=cost,
    )(x_p, w_p, b_p)

    return out_p[:num_qrys, :num_labels]


def cls_head_pred_ref(qry_feats, weight, bias):
    return qry_feats @ weight + bias[None, :]


# --------------------------------------------------------------------------- #
# Self-test
# --------------------------------------------------------------------------- #
if __name__ == "__main__":
    # Small deterministic shapes consistent with forward_pred:
    # qry_feats: [num_qrys, qry_feat_size] -> cls_logits: [num_qrys, num_labels]
    num_qrys, qry_feat_size, num_labels = 16, 32, 8

    key = jax.random.PRNGKey(0)
    k_x, k_w, k_b = jax.random.split(key, 3)
    qry_feats = jax.random.normal(k_x, (num_qrys, qry_feat_size), dtype=jnp.float32)
    weight = jax.random.normal(k_w, (qry_feat_size, num_labels), dtype=jnp.float32) * 0.02
    bias = jax.random.normal(k_b, (num_labels,), dtype=jnp.float32) * 0.01

    # 1) f32 full-K fast path (single grid block), strict check.
    cls_logits = cls_head_pred(qry_feats, weight, bias)
    jax.block_until_ready(cls_logits)
    ref = cls_head_pred_ref(qry_feats, weight, bias)
    assert cls_logits.shape == (num_qrys, num_labels)
    assert jnp.allclose(cls_logits, ref, atol=1e-5, rtol=1e-5), "mismatch vs reference"

    # 2) Multi-tile grid with K reduction + Q/N padding (small tile caps force
    #    the K-tiled kernel: grid = (3, 2, 3)).
    nq2, f2, nl2 = 272, 384, 200
    k1, k2, k3 = jax.random.split(jax.random.PRNGKey(1), 3)
    x2 = jax.random.normal(k1, (nq2, f2), dtype=jnp.float32)
    w2 = jax.random.normal(k2, (f2, nl2), dtype=jnp.float32) * 0.02
    b2 = jax.random.normal(k3, (nl2,), dtype=jnp.float32) * 0.01
    out2 = cls_head_pred(x2, w2, b2, tile_q=128, tile_n=128, tile_k=128)
    jax.block_until_ready(out2)
    ref2 = cls_head_pred_ref(x2, w2, b2)
    assert out2.shape == (nq2, nl2)
    assert jnp.allclose(out2, ref2, atol=1e-4, rtol=1e-4), "tiled mismatch vs reference"

    # 3) Same problem with default (large) tiles + cached prepared params
    #    (hot-path W pad/cast hoisted out).
    prep = prepare_cls_head_params(w2, b2)
    out3 = cls_head_pred(x2, w2, b2, prepared_params=prep)
    jax.block_until_ready(out3)
    assert jnp.allclose(out3, ref2, atol=1e-4, rtol=1e-4), "prepared-params mismatch"

    # 4) GEMV-like regime (few queries, many labels): exercises the N split /
    #    deeper W pipeline path.
    nq4, f4, nl4 = 8, 256, 2048
    k4, k5, k6 = jax.random.split(jax.random.PRNGKey(2), 3)
    x4 = jax.random.normal(k4, (nq4, f4), dtype=jnp.float32)
    w4 = jax.random.normal(k5, (f4, nl4), dtype=jnp.float32) * 0.02
    b4 = jax.random.normal(k6, (nl4,), dtype=jnp.float32) * 0.01
    out4 = cls_head_pred(x4, w4, b4)
    jax.block_until_ready(out4)
    ref4 = cls_head_pred_ref(x4, w4, b4)
    assert out4.shape == (nq4, nl4)
    assert jnp.allclose(out4, ref4, atol=1e-4, rtol=1e-4), "gemv-regime mismatch"

    # 5) bf16-operand MXU fast path (f32 accumulation), loose tolerance.
    out_bf16 = cls_head_pred(qry_feats, weight, bias, compute_dtype=jnp.bfloat16)
    jax.block_until_ready(out_bf16)
    assert jnp.allclose(out_bf16, ref, atol=3e-2, rtol=3e-2), "bf16 path mismatch"

    # storage_dict['cls_logits'] = cls_logits   (glue stays in plain Python)
    storage_dict = {"cls_logits": cls_logits}

    print("KERNEL_OK")
</pallas_src>

<mosaic_0001>
module attributes {stable_mosaic.version = 11 : i64} {
  func.func @_cls_logits_fullk_kernel(%arg0: i32, %arg1: i32, %arg2: memref<16x128xf32, #tpu.memory_space<vmem>>, %arg3: memref<128x128xf32, #tpu.memory_space<vmem>>, %arg4: memref<1x128xf32, #tpu.memory_space<vmem>>, %arg5: memref<16x128xf32, #tpu.memory_space<vmem>>) attributes {dimension_semantics = [#tpu.dimension_semantics<parallel>, #tpu.dimension_semantics<parallel>], iteration_bounds = array<i64: 1, 1>, scalar_prefetch = 0 : i64, scratch_operands = 0 : i64, tpu.core_type = #tpu.core_type<tc>, window_params = [{transform_indices = @transform_0, window_bounds = array<i64: 16, 128>}, {transform_indices = @transform_1, window_bounds = array<i64: 128, 128>}, {transform_indices = @transform_2, window_bounds = array<i64: 1, 128>}, {transform_indices = @transform_3, window_bounds = array<i64: 16, 128>}]} {
    %c0 = arith.constant 0 : index
    %c0_0 = arith.constant 0 : index
    %0 = vector.load %arg2[%c0, %c0_0] : memref<16x128xf32, #tpu.memory_space<vmem>>, vector<16x128xf32>
    %c0_1 = arith.constant 0 : index
    %c0_2 = arith.constant 0 : index
    %1 = vector.load %arg3[%c0_1, %c0_2] : memref<128x128xf32, #tpu.memory_space<vmem>>, vector<128x128xf32>
    %cst = arith.constant dense<0.000000e+00> : vector<16x128xf32>
    %2 = tpu.matmul %0, %1, %cst {dimension_numbers = #tpu.dot_dimension_numbers<[1], [0], [0], [1], [0, 0, 1, 1], [], []>} : vector<16x128xf32>, vector<128x128xf32>, vector<16x128xf32> -> vector<16x128xf32>
    %c0_3 = arith.constant 0 : index
    %c0_4 = arith.constant 0 : index
    %3 = vector.load %arg4[%c0_3, %c0_4] : memref<1x128xf32, #tpu.memory_space<vmem>>, vector<1x128xf32>
    %4 = vector.broadcast %3 : vector<1x128xf32> to vector<16x128xf32>
    %5 = arith.addf %2, %4 : vector<16x128xf32>
    %c0_5 = arith.constant 0 : index
    %c0_6 = arith.constant 0 : index
    %6 = vector.load %arg5[%c0_5, %c0_6] : memref<16x128xf32, #tpu.memory_space<vmem>>, vector<16x128xf32>
    tpu.vector_store %arg5[%c0_5, %c0_6], %5 {strides = array<i32>} : memref<16x128xf32, #tpu.memory_space<vmem>>, vector<16x128xf32>,
    return
  }
  func.func @transform_0(%arg0: i32, %arg1: i32) -> (i32, i32) {
    %c0_i32 = arith.constant 0 : i32
    %c0_i32_0 = arith.constant 0 : i32
    return %arg0, %c0_i32 : i32, i32
  }
  func.func @transform_1(%arg0: i32, %arg1: i32) -> (i32, i32) {
    %c0_i32 = arith.constant 0 : i32
    %c0_i32_0 = arith.constant 0 : i32
    return %c0_i32, %arg1 : i32, i32
  }
  func.func @transform_2(%arg0: i32, %arg1: i32) -> (i32, i32) {
    %c0_i32 = arith.constant 0 : i32
    %c0_i32_0 = arith.constant 0 : i32
    return %c0_i32, %arg1 : i32, i32
  }
  func.func @transform_3(%arg0: i32, %arg1: i32) -> (i32, i32) {
    %c0_i32 = arith.constant 0 : i32
    return %arg0, %arg1 : i32, i32
  }
}

</mosaic_0001>

<llo_original>
// kernel: tpu_custom_call.1
$region0: #{tpu_custom_call.1}
  #allocation0 [shape = 'u32[]', space=smem, size = 0x4, offset = 0x4, fixed_abs, tag = 'smem constant byte address 0x4 - core index']
  #allocation1 [shape = 'u32[144,128]{1,0:T(1,128)}', space=vmem, size = 0x12000, scoped, tag = 'internal scratch']
  %s0 = inlined_call_operand.hbm [shape: f32[16,128], index: 0, kind: input, shape index: {}]
  %s1 = inlined_call_operand.hbm [shape: f32[128,128], index: 1, kind: input, shape index: {}]
  %s2 = inlined_call_operand.vmem [shape: f32[1,128], index: 2, kind: input, shape index: {}]
  %s3 = inlined_call_operand.hbm [shape: f32[16,128], index: 3, kind: output, shape index: {}]
  %s4 = sld [smem:[#allocation0]]
  $region30: #{tpu_custom_call.1} parent=0
    _
  %s6 = ssub.s32 1, %s4
  %s7 = scalar_select 0, %s6, %s4
  $region1: #{tpu_custom_call.1} parent=0
    #allocation2 [shape = 'u8[8192]{0}', space=vmem, size = 0x2000, scoped, tag = 'input window, operand 0, single buffered']
    #allocation3 [shape = 's32[1]{0}', space=sflag, size = 0x4, scoped, tag = 'scoped memory for tpu_custom_call.1']
    #allocation4 [shape = 's32[1]{0}', space=sflag, size = 0x4, scoped, tag = 'scoped memory for tpu_custom_call.1']
    #allocation5 [shape = 'u8[65536]{0}', space=vmem, size = 0x10000, scoped, tag = 'input window, operand 1, single buffered']
    #allocation6 [shape = 's32[1]{0}', space=sflag, size = 0x4, scoped, tag = 'scoped memory for tpu_custom_call.1']
    #allocation7 [shape = 'u8[8192]{0}', space=vmem, size = 0x2000, scoped, tag = 'output window, operand 0, single buffered']
    %8 = vsyncpa [#allocation3], 0
    %9 = vsyncpa [#allocation6], 0
    %10 = vsyncpa [#allocation4], 0
    // Predicated region
    $region2: #{tpu_custom_call.1} parent=1 // pred_check
      _
    $region3: #{tpu_custom_call.1} parent=1 // pred_check_branch
      %12 = sbr.rel (0) target = $region5
    $region4: #{tpu_custom_call.1} parent=1 // pred_region
      %s14 = ssub.s32 256, 256
      %15 = vsyncadd [#allocation3], %s14
      %s16 = sshll.u32 [#allocation2], 4
      %s17 = int_to_ptr.vmem [resolvable:$true] %s16
      %22 = dma.hbm_to_vmem [thread:$0]  %s0, 256, %s17, [#allocation3], 128, 128, 8
    $region5: #{tpu_custom_call.1} parent=1 // pred_fallthru
      _
    // Predicated region
    $region6: #{tpu_custom_call.1} parent=1 // pred_check
      _
    $region7: #{tpu_custom_call.1} parent=1 // pred_check_branch
      %24 = sbr.rel (0) target = $region9
    $region8: #{tpu_custom_call.1} parent=1 // pred_region
      %s26 = ssub.s32 2048, 2048
      %27 = vsyncadd [#allocation6], %s26
      %s28 = sshll.u32 [#allocation5], 4
      %s29 = int_to_ptr.vmem [resolvable:$true] %s28
      %34 = dma.hbm_to_vmem [thread:$0]  %s1, 2048, %s29, [#allocation6], 128, 128, 8
    $region9: #{tpu_custom_call.1} parent=1 // pred_fallthru
      _
    // Predicated region
    $region10: #{tpu_custom_call.1} parent=1 // pred_check
      _
    $region11: #{tpu_custom_call.1} parent=1 // pred_check_branch
      %36 = sbr.rel (0) target = $region13
    $region12: #{tpu_custom_call.1} parent=1 // pred_region
      _
    $region13: #{tpu_custom_call.1} parent=1 // pred_fallthru
      _
    // Predicated region
    $region14: #{tpu_custom_call.1} parent=1 // pred_check
      _
    $region15: #{tpu_custom_call.1} parent=1 // pred_check_branch
      %38 = sbr.rel (0) target = $region17
    $region16: #{tpu_custom_call.1} parent=1 // pred_region
      %39 = dma.done [#allocation3], 256
    $region17: #{tpu_custom_call.1} parent=1 // pred_fallthru
      _
    // Predicated region
    $region18: #{tpu_custom_call.1} parent=1 // pred_check
      _
    $region19: #{tpu_custom_call.1} parent=1 // pred_check_branch
      %41 = sbr.rel (0) target = $region21
    $region20: #{tpu_custom_call.1} parent=1 // pred_region
      %42 = dma.done [#allocation6], 2048
    $region21: #{tpu_custom_call.1} parent=1 // pred_fallthru
      _
    %v43 = vld [vmem:[#allocation2] sm:$0xff]
    %v44 = vld [vmem:[#allocation2 + $0x8] sm:$0xff]
    %v45 = vld [vmem:[#allocation5] sm:$0xff]
    %v46 = vld [vmem:[#allocation5 + $0x8] sm:$0xff]
    %v47 = vld [vmem:[#allocation5 + $0x10] sm:$0xff]
    %v48 = vld [vmem:[#allocation5 + $0x18] sm:$0xff]
    %v49 = vld [vmem:[#allocation5 + $0x20] sm:$0xff]
    %v50 = vld [vmem:[#allocation5 + $0x28] sm:$0xff]
    %v51 = vld [vmem:[#allocation5 + $0x30] sm:$0xff]
    %v52 = vld [vmem:[#allocation5 + $0x38] sm:$0xff]
    %v53 = vld [vmem:[#allocation5 + $0x40] sm:$0xff]
    %v54 = vld [vmem:[#allocation5 + $0x48] sm:$0xff]
    %v55 = vld [vmem:[#allocation5 + $0x50] sm:$0xff]
    %v56 = vld [vmem:[#allocation5 + $0x58] sm:$0xff]
    %v57 = vld [vmem:[#allocation5 + $0x60] sm:$0xff]
    %v58 = vld [vmem:[#allocation5 + $0x68] sm:$0xff]
    %v59 = vld [vmem:[#allocation5 + $0x70] sm:$0xff]
    %v60 = vld [vmem:[#allocation5 + $0x78] sm:$0xff]
    %v61 = vld [vmem:[%s2] sm:$0x1]
    %v63 = vlaneseq
    %v64 = vshrl.u32 %v63, 7
    %v65 = vsub.s32 0, %v64
    %v66 = vrot.slane %v61, %v65
    %68 = vmatprep.subr.mxu0 0.0
    %69 = vmatpush1.msra.mxu0 %v45
    %70 = vmatprep.subr.mxu0 0.0
    %71 = vmatpush1.msra.mxu0 %v46
    %72 = vmatprep.subr.mxu0 0.0
    %73 = vmatpush1.msra.mxu0 %v47
    %74 = vmatprep.subr.mxu0 0.0
    %75 = vmatpush1.msra.mxu0 %v48
    %76 = vmatprep.subr.mxu0 0.0
    %77 = vmatpush1.msra.mxu0 %v49
    %78 = vmatprep.subr.mxu0 0.0
    %79 = vmatpush1.msra.mxu0 %v50
    %80 = vmatprep.subr.mxu0 0.0
    %81 = vmatpush1.msra.mxu0 %v51
    %82 = vmatprep.subr.mxu0 0.0
    %83 = vmatpush1.msra.mxu0 %v52
    %84 = vmatprep.subr.mxu0 0.0
    %85 = vmatpush1.msra.mxu0 %v53
    %86 = vmatprep.subr.mxu0 0.0
    %87 = vmatpush1.msra.mxu0 %v54
    %88 = vmatprep.subr.mxu0 0.0
    %89 = vmatpush1.msra.mxu0 %v55
    %90 = vmatprep.subr.mxu0 0.0
    %91 = vmatpush1.msra.mxu0 %v56
    %92 = vmatprep.subr.mxu0 0.0
    %93 = vmatpush1.msra.mxu0 %v57
    %94 = vmatprep.subr.mxu0 0.0
    %95 = vmatpush1.msra.mxu0 %v58
    %96 = vmatprep.subr.mxu0 0.0
    %97 = vmatpush1.msra.mxu0 %v59
    %98 = vmatprep.subr.mxu0 0.0
    %99 = vmatpush1.msra.mxu0 %v60
    %100 = vmatprep.subr.mxu0 0.0
    %101 = vmatpush1.msra.mxu0 0.0
    %102 = vmatprep.subr.mxu0 0.0
    %103 = vmatpush1.msra.mxu0 0.0
    %104 = vmatprep.subr.mxu0 0.0
    %105 = vmatpush1.msra.mxu0 0.0
    %106 = vmatprep.subr.mxu0 0.0
    %107 = vmatpush1.msra.mxu0 0.0
    %108 = vmatprep.subr.mxu0 0.0
    %109 = vmatpush1.msra.mxu0 0.0
    %110 = vmatprep.subr.mxu0 0.0
    %111 = vmatpush1.msra.mxu0 0.0
    %112 = vmatprep.subr.mxu0 0.0
    %113 = vmatpush1.msra.mxu0 0.0
    %114 = vmatprep.subr.mxu0 0.0
    %115 = vmatpush1.msra.mxu0 0.0
    %116 = vmatprep.subr.mxu0 0.0
    %117 = vmatpush1.msra.mxu0 0.0
    %118 = vmatprep.subr.mxu0 0.0
    %119 = vmatpush1.msra.mxu0 0.0
    %120 = vmatprep.subr.mxu0 0.0
    %121 = vmatpush1.msra.mxu0 0.0
    %122 = vmatprep.subr.mxu0 0.0
    %123 = vmatpush1.msra.mxu0 0.0
    %124 = vmatprep.subr.mxu0 0.0
    %125 = vmatpush1.msra.mxu0 0.0
    %126 = vmatprep.subr.mxu0 0.0
    %127 = vmatpush1.msra.mxu0 0.0
    %128 = vmatprep.subr.mxu0 0.0
    %129 = vmatpush1.msra.mxu0 0.0
    %130 = vmatprep.subr.mxu0 0.0
    %131 = vmatpush1.msra.mxu0 0.0
    %132 = vmatprep.mubr.f32.mxu0 0.0
    %133 = vmatmul.mubr.f32.gmra.mrb[0].mxu0 %v43
    %v134 = vpop.f32.mrb[0].mxu0
    %v135 = vadd.f32 %v66, %v134
    %v136 = vpop.f32.mrb[0].mxu0
    %137 = vmatprep.mubr.f32.mxu0 0.0
    %138 = vmatmul.mubr.f32.gmra.mrb[0].mxu0 %v44
    %v139 = vpop.f32.mrb[0].mxu0
    %v140 = vadd.f32 %v66, %v139
    %v141 = vpop.f32.mrb[0].mxu0
    %142 = vdwg.mxu0
    %143 = vst [vmem:[#allocation7] sm:$0xff] %v135
    %144 = vst [vmem:[#allocation7 + $0x8] sm:$0xff] %v140
    // Predicated region
    $region22: #{tpu_custom_call.1} parent=1 // pred_check
      _
    $region23: #{tpu_custom_call.1} parent=1 // pred_check_branch
      %146 = sbr.rel (0) target = $region25
    $region24: #{tpu_custom_call.1} parent=1 // pred_region
      %s148 = ssub.s32 256, 256
      %149 = vsyncadd [#allocation4], %s148
      %s150 = sshll.u32 [#allocation7], 4
      %s151 = int_to_ptr.vmem [resolvable:$true] %s150
      %156 = dma.vmem_to_hbm [thread:$0]  %s151, 256, %s3, [#allocation4], 128, 128, 8
    $region25: #{tpu_custom_call.1} parent=1 // pred_fallthru
      _
    // Predicated region
    $region26: #{tpu_custom_call.1} parent=1 // pred_check
      _
    $region27: #{tpu_custom_call.1} parent=1 // pred_check_branch
      %158 = sbr.rel (0) target = $region29
    $region28: #{tpu_custom_call.1} parent=1 // pred_region
      %159 = dma.done [#allocation4], 256
    $region29: #{tpu_custom_call.1} parent=1 // pred_fallthru
      _
    %160 = vsyncpa [#allocation3], 1
    %161 = vsyncpa [#allocation6], 1
    %162 = vsyncpa [#allocation4], 1

</llo_original>
